<compile_context>
chip_gen: v5e
topology: v5e:2x2
jax: 0.10.0
libtpu: 0.0.40
codegen_flags: <defaults>
</compile_context>

<pallas_src>
import functools

import jax
import jax.numpy as jnp
from jax import lax
from jax.experimental import pallas as pl
from jax.experimental.pallas import tpu as pltpu


# ----------------------------------------------------------------------------
# Fused kernel: conv(+ReLU) -> fc1(+ReLU) -> fc2 -> softmax & sigmoid.
# One grid step processes one batch element.
# ----------------------------------------------------------------------------
def _stable_sigmoid(v):
    # Numerically stable sigmoid; the divide is an approximate EUP reciprocal.
    e = jnp.exp(-jnp.abs(v))
    r = pl.reciprocal(1.0 + e, approx=True)
    return jnp.where(v >= 0.0, r, e * r)


def _jug_fused_kernel(pt_ref, wc_ref, w1_ref, w2_ref, b1_ref, b2_ref,
                      label_ref, net_ref):
    """Refs:
      pt_ref : (1, K, S)     bf16  im2col patches; K = Cin*ks*ks, S = Ho*Wo
      wc_ref : (Cout, K)     bf16  conv weight (row-major (cin, i, j) columns)
      w1_ref : (ks*ks, hid)  bf16  fc1 weight (in, out)
      w2_ref : (hid, 2)      bf16  fc2 weight (in, out)
      b1_ref : (1, hid)      f32   fc1 bias (VMEM row, broadcast over sublanes)
      b2_ref : (1, 2)        f32   fc2 bias
      label_ref / net_ref : (1, Cout, 2) f32 outputs
    """
    ncls = w2_ref.shape[1]  # == 2 for this model

    # conv1 + ReLU as a lane-dense matmul: (Cout, K) @ (K, S) -> (Cout, S).
    patches = pt_ref[0]                                          # (K, S) bf16
    cn = jnp.dot(wc_ref[...], patches,
                 preferred_element_type=jnp.float32)             # (Cout, S) f32
    cn = jnp.maximum(cn, 0.0)
    # Because S == ks*ks, row c of `cn` is exactly one row of the PyTorch
    # cn1.reshape(-1, ks*ks) flatten for this batch element (NCHW order).

    # fc1 + bias + ReLU (bias is a (1, hid) row, broadcast over sublanes).
    h = jnp.dot(cn.astype(jnp.bfloat16), w1_ref[...],
                preferred_element_type=jnp.float32)              # (Cout, hid)
    h = jnp.maximum(h + b1_ref[...], 0.0)

    # fc2 + bias.
    z = jnp.dot(h.astype(jnp.bfloat16), w2_ref[...],
                preferred_element_type=jnp.float32) + b2_ref[...]  # (Cout, 2)

    # judge_net = sigmoid(fc2 output)
    net_ref[0] = _stable_sigmoid(z)

    # judge_label = softmax over the 2 classes, computed without cross-lane
    # reductions:  softmax = [1 - sigmoid(z1 - z0), sigmoid(z1 - z0)].
    d = z[:, 1:2] - z[:, 0:1]                                    # (Cout, 1)
    sp = _stable_sigmoid(d)
    col = lax.broadcasted_iota(jnp.int32, (1, ncls), 1)
    label_ref[0] = jnp.where(col == 1, sp, 1.0 - sp)


# ----------------------------------------------------------------------------
# Host-side glue: im2col prep, parameter init, full forward.
# ----------------------------------------------------------------------------
def _im2col_per_batch(x, ks):
    """x (B, Cin, H, W) -> (B, Cin*ks*ks, Ho*Wo); rows ordered (cin, i, j),
    columns ordered (h, w); valid conv, stride 1."""
    b, c, hh, ww = x.shape
    ho, wo = hh - ks + 1, ww - ks + 1
    blocks = [x[:, :, i:i + ho, j:j + wo] for i in range(ks) for j in range(ks)]
    p = jnp.stack(blocks, axis=2)                  # (B, Cin, ks*ks, Ho, Wo)
    return p.reshape(b, c * ks * ks, ho * wo), (ho, wo)


def init_params(key, kernel_size, net_sum, c_in):
    k1, k2, k3, k4, k5 = jax.random.split(key, 5)
    ks2 = kernel_size * kernel_size
    hid = kernel_size // 2
    conv_w = jax.random.normal(k1, (net_sum, c_in, kernel_size, kernel_size),
                               jnp.float32) * 0.05
    # nn.Linear-style uniform(-1/sqrt(fan_in), 1/sqrt(fan_in)) init.
    lim1 = 1.0 / jnp.sqrt(ks2)
    fc1_w = jax.random.uniform(k2, (ks2, hid), jnp.float32, -lim1, lim1)
    fc1_b = jax.random.uniform(k3, (hid,), jnp.float32, -lim1, lim1)
    lim2 = 1.0 / jnp.sqrt(hid)
    fc2_w = jax.random.uniform(k4, (hid, 2), jnp.float32, -lim2, lim2)
    fc2_b = jax.random.uniform(k5, (2,), jnp.float32, -lim2, lim2)
    return dict(conv_w=conv_w, fc1_w=fc1_w, fc1_b=fc1_b,
                fc2_w=fc2_w, fc2_b=fc2_b)


@functools.partial(jax.jit, static_argnames=("kernel_size",))
def jug_forward(x, params, kernel_size):
    ks = kernel_size
    ks2 = ks * ks
    hid = ks // 2
    cout = params["conv_w"].shape[0]
    bsz = x.shape[0]

    patches, (ho, wo) = _im2col_per_batch(x, ks)
    # TODO(synk): the fused kernel assumes Ho*Wo == kernel_size**2 so that the
    # PyTorch NCHW reshape(-1, ks*ks) maps each (batch, channel) spatial map to
    # exactly one fc1 row; other conv geometries would need an extra in-kernel
    # reorder.
    assert ho * wo == ks2, (
        f"fused JUG kernel requires Ho*Wo == kernel_size**2 "
        f"(got {ho}*{wo} vs {ks2})")
    k_dim = patches.shape[1]

    # bf16 MXU operands, f32 everywhere else.
    patches = patches.astype(jnp.bfloat16)
    wc = params["conv_w"].reshape(cout, k_dim).astype(jnp.bfloat16)
    w1 = params["fc1_w"].astype(jnp.bfloat16)
    w2 = params["fc2_w"].astype(jnp.bfloat16)
    b1 = params["fc1_b"].reshape(1, hid).astype(jnp.float32)
    b2 = params["fc2_b"].reshape(1, 2).astype(jnp.float32)

    label_b, net_b = pl.pallas_call(
        _jug_fused_kernel,
        out_shape=(
            jax.ShapeDtypeStruct((bsz, cout, 2), jnp.float32),
            jax.ShapeDtypeStruct((bsz, cout, 2), jnp.float32),
        ),
        grid=(bsz,),
        in_specs=[
            pl.BlockSpec((1, k_dim, ks2), lambda i: (i, 0, 0)),
            pl.BlockSpec((cout, k_dim), lambda i: (0, 0)),
            pl.BlockSpec((ks2, hid), lambda i: (0, 0)),
            pl.BlockSpec((hid, 2), lambda i: (0, 0)),
            pl.BlockSpec((1, hid), lambda i: (0, 0)),
            pl.BlockSpec((1, 2), lambda i: (0, 0)),
        ],
        out_specs=(
            pl.BlockSpec((1, cout, 2), lambda i: (i, 0, 0)),
            pl.BlockSpec((1, cout, 2), lambda i: (i, 0, 0)),
        ),
        compiler_params=pltpu.CompilerParams(
            dimension_semantics=("parallel",)),
    )(patches, wc, w1, w2, b1, b2)

    judge_label = label_b.reshape(bsz * cout, 2)
    judge_net = net_b.reshape(bsz * cout, 2)
    return judge_label, judge_net


def jug_forward_reference(x, params, kernel_size):
    """Pure-JAX (f32) reference with the same semantics, for validation."""
    ks = kernel_size
    cn1 = lax.conv_general_dilated(
        x.astype(jnp.float32), params["conv_w"].astype(jnp.float32),
        window_strides=(1, 1), padding="VALID",
        dimension_numbers=("NCHW", "OIHW", "NCHW"))
    cn1 = jnp.maximum(cn1, 0.0)
    cn2 = cn1.reshape(-1, ks * ks)
    h = jnp.maximum(cn2 @ params["fc1_w"] + params["fc1_b"][None, :], 0.0)
    z = h @ params["fc2_w"] + params["fc2_b"][None, :]
    return jax.nn.softmax(z, axis=-1), jax.nn.sigmoid(z)


if __name__ == "__main__":
    kernel_size = 8       # fc1: 64 -> 4, fc2: 4 -> 2
    net_sum = 4           # conv output channels
    c_in = 4
    B, H, W = 2, 15, 15   # valid conv -> 8x8 spatial, so Ho*Wo == kernel_size**2

    key = jax.random.PRNGKey(0)
    kp, kx = jax.random.split(key)
    params = init_params(kp, kernel_size, net_sum, c_in)
    x = jax.random.normal(kx, (B, c_in, H, W), jnp.float32)

    judge_label, judge_net = jug_forward(x, params, kernel_size)
    jax.block_until_ready((judge_label, judge_net))

    # Shape / sanity checks against the pure-JAX reference (bf16 MXU operands
    # + approx reciprocal in the kernel -> loose tolerance on probabilities).
    ref_label, ref_net = jug_forward_reference(x, params, kernel_size)
    rows = (B * net_sum * (H - kernel_size + 1) * (W - kernel_size + 1)
            ) // (kernel_size * kernel_size)
    assert judge_label.shape == judge_net.shape == (rows, 2)
    assert bool(jnp.all(jnp.isfinite(judge_label)))
    assert bool(jnp.all(jnp.isfinite(judge_net)))
    assert float(jnp.max(jnp.abs(judge_label - ref_label))) < 5e-2
    assert float(jnp.max(jnp.abs(judge_net - ref_net))) < 5e-2
    print("KERNEL_OK")
</pallas_src>

<mosaic_0001>
module attributes {stable_mosaic.version = 11 : i64} {
  func.func @_jug_fused_kernel(%arg0: i32, %arg1: memref<1x256x64xbf16, #tpu.memory_space<vmem>>, %arg2: memref<4x256xbf16, #tpu.memory_space<vmem>>, %arg3: memref<64x4xbf16, #tpu.memory_space<vmem>>, %arg4: memref<4x2xbf16, #tpu.memory_space<vmem>>, %arg5: memref<1x4xf32, #tpu.memory_space<vmem>>, %arg6: memref<1x2xf32, #tpu.memory_space<vmem>>, %arg7: memref<1x4x2xf32, #tpu.memory_space<vmem>>, %arg8: memref<1x4x2xf32, #tpu.memory_space<vmem>>) attributes {dimension_semantics = [#tpu.dimension_semantics<parallel>], iteration_bounds = array<i64: 2>, scalar_prefetch = 0 : i64, scratch_operands = 0 : i64, tpu.core_type = #tpu.core_type<tc>, window_params = [{transform_indices = @transform_0, window_bounds = array<i64: 1, 256, 64>}, {pipeline_mode = #tpu.pipeline_mode<synchronous>, transform_indices = @transform_1, window_bounds = array<i64: 4, 256>}, {pipeline_mode = #tpu.pipeline_mode<synchronous>, transform_indices = @transform_2, window_bounds = array<i64: 64, 4>}, {pipeline_mode = #tpu.pipeline_mode<synchronous>, transform_indices = @transform_3, window_bounds = array<i64: 4, 2>}, {pipeline_mode = #tpu.pipeline_mode<synchronous>, transform_indices = @transform_4, window_bounds = array<i64: 1, 4>}, {pipeline_mode = #tpu.pipeline_mode<synchronous>, transform_indices = @transform_5, window_bounds = array<i64: 1, 2>}, {transform_indices = @transform_6, window_bounds = array<i64: 1, 4, 2>}, {transform_indices = @transform_7, window_bounds = array<i64: 1, 4, 2>}]} {
    %c0 = arith.constant 0 : index
    %c0_0 = arith.constant 0 : index
    %c0_1 = arith.constant 0 : index
    %0 = vector.load %arg1[%c0, %c0_0, %c0_1] : memref<1x256x64xbf16, #tpu.memory_space<vmem>>, vector<1x256x64xbf16>
    %1 = vector.shape_cast %0 : vector<1x256x64xbf16> to vector<256x64xbf16>
    %c0_2 = arith.constant 0 : index
    %c0_3 = arith.constant 0 : index
    %2 = vector.load %arg2[%c0_2, %c0_3] : memref<4x256xbf16, #tpu.memory_space<vmem>>, vector<4x256xbf16>
    %cst = arith.constant dense<0.000000e+00> : vector<4x64xf32>
    %3 = tpu.matmul %2, %1, %cst {dimension_numbers = #tpu.dot_dimension_numbers<[1], [0], [0], [1], [0, 0, 1, 1], [], []>} : vector<4x256xbf16>, vector<256x64xbf16>, vector<4x64xf32> -> vector<4x64xf32>
    %cst_4 = arith.constant 0.000000e+00 : f32
    %4 = vector.broadcast %cst_4 : f32 to vector<4x64xf32>
    %5 = arith.maximumf %3, %4 : vector<4x64xf32>
    %6 = arith.truncf %5 : vector<4x64xf32> to vector<4x64xbf16>
    %c0_5 = arith.constant 0 : index
    %c0_6 = arith.constant 0 : index
    %7 = vector.load %arg3[%c0_5, %c0_6] : memref<64x4xbf16, #tpu.memory_space<vmem>>, vector<64x4xbf16>
    %cst_7 = arith.constant dense<0.000000e+00> : vector<4x4xf32>
    %8 = tpu.matmul %6, %7, %cst_7 {dimension_numbers = #tpu.dot_dimension_numbers<[1], [0], [0], [1], [0, 0, 1, 1], [], []>} : vector<4x64xbf16>, vector<64x4xbf16>, vector<4x4xf32> -> vector<4x4xf32>
    %c0_8 = arith.constant 0 : index
    %c0_9 = arith.constant 0 : index
    %9 = vector.load %arg5[%c0_8, %c0_9] : memref<1x4xf32, #tpu.memory_space<vmem>>, vector<1x4xf32>
    %10 = vector.broadcast %9 : vector<1x4xf32> to vector<4x4xf32>
    %11 = arith.addf %8, %10 : vector<4x4xf32>
    %cst_10 = arith.constant 0.000000e+00 : f32
    %12 = vector.broadcast %cst_10 : f32 to vector<4x4xf32>
    %13 = arith.maximumf %11, %12 : vector<4x4xf32>
    %14 = arith.truncf %13 : vector<4x4xf32> to vector<4x4xbf16>
    %c0_11 = arith.constant 0 : index
    %c0_12 = arith.constant 0 : index
    %15 = vector.load %arg4[%c0_11, %c0_12] : memref<4x2xbf16, #tpu.memory_space<vmem>>, vector<4x2xbf16>
    %cst_13 = arith.constant dense<0.000000e+00> : vector<4x2xf32>
    %16 = tpu.matmul %14, %15, %cst_13 {dimension_numbers = #tpu.dot_dimension_numbers<[1], [0], [0], [1], [0, 0, 1, 1], [], []>} : vector<4x4xbf16>, vector<4x2xbf16>, vector<4x2xf32> -> vector<4x2xf32>
    %c0_14 = arith.constant 0 : index
    %c0_15 = arith.constant 0 : index
    %17 = vector.load %arg6[%c0_14, %c0_15] : memref<1x2xf32, #tpu.memory_space<vmem>>, vector<1x2xf32>
    %18 = vector.broadcast %17 : vector<1x2xf32> to vector<4x2xf32>
    %19 = arith.addf %16, %18 : vector<4x2xf32>
    %20 = math.absf %19 : vector<4x2xf32>
    %cst_16 = arith.constant 0.000000e+00 : f32
    %21 = vector.broadcast %cst_16 : f32 to vector<4x2xf32>
    %22 = arith.subf %21, %20 : vector<4x2xf32>
    %23 = math.exp %22 : vector<4x2xf32>
    %cst_17 = arith.constant 1.000000e+00 : f32
    %24 = vector.broadcast %cst_17 : f32 to vector<4x2xf32>
    %25 = arith.addf %24, %23 : vector<4x2xf32>
    %26 = tpu.reciprocal %25 {approx = true} : vector<4x2xf32> -> vector<4x2xf32>
    %cst_18 = arith.constant 0.000000e+00 : f32
    %27 = vector.broadcast %cst_18 : f32 to vector<4x2xf32>
    %28 = arith.cmpf oge, %19, %27 : vector<4x2xf32>
    %29 = arith.mulf %23, %26 : vector<4x2xf32>
    %30 = arith.select %28, %26, %29 : vector<4x2xi1>, vector<4x2xf32>
    %c0_19 = arith.constant 0 : index
    %c0_20 = arith.constant 0 : index
    %c0_21 = arith.constant 0 : index
    %31 = vector.load %arg8[%c0_19, %c0_20, %c0_21] : memref<1x4x2xf32, #tpu.memory_space<vmem>>, vector<1x4x2xf32>
    %32 = vector.shape_cast %31 : vector<1x4x2xf32> to vector<4x2xf32>
    %33 = vector.shape_cast %30 : vector<4x2xf32> to vector<1x4x2xf32>
    tpu.vector_store %arg8[%c0_19, %c0_20, %c0_21], %33 {strides = array<i32>} : memref<1x4x2xf32, #tpu.memory_space<vmem>>, vector<1x4x2xf32>,
    %34 = vector.extract_strided_slice %19 {offsets = [0, 1], sizes = [4, 1], strides = [1, 1]} : vector<4x2xf32> to vector<4x1xf32>
    %35 = vector.extract_strided_slice %19 {offsets = [0, 0], sizes = [4, 1], strides = [1, 1]} : vector<4x2xf32> to vector<4x1xf32>
    %36 = arith.subf %34, %35 : vector<4x1xf32>
    %37 = math.absf %36 : vector<4x1xf32>
    %cst_22 = arith.constant 0.000000e+00 : f32
    %38 = vector.broadcast %cst_22 : f32 to vector<4x1xf32>
    %39 = arith.subf %38, %37 : vector<4x1xf32>
    %40 = math.exp %39 : vector<4x1xf32>
    %cst_23 = arith.constant 1.000000e+00 : f32
    %41 = vector.broadcast %cst_23 : f32 to vector<4x1xf32>
    %42 = arith.addf %41, %40 : vector<4x1xf32>
    %43 = tpu.reciprocal %42 {approx = true} : vector<4x1xf32> -> vector<4x1xf32>
    %cst_24 = arith.constant 0.000000e+00 : f32
    %44 = vector.broadcast %cst_24 : f32 to vector<4x1xf32>
    %45 = arith.cmpf oge, %36, %44 : vector<4x1xf32>
    %46 = arith.mulf %40, %43 : vector<4x1xf32>
    %47 = arith.select %45, %43, %46 : vector<4x1xi1>, vector<4x1xf32>
    %48 = tpu.iota {dimensions = array<i32: 1>} : vector<1x2xi32>
    %c1_i32 = arith.constant 1 : i32
    %49 = vector.broadcast %c1_i32 : i32 to vector<1x2xi32>
    %50 = arith.cmpi eq, %48, %49 : vector<1x2xi32>
    %cst_25 = arith.constant 1.000000e+00 : f32
    %51 = vector.broadcast %cst_25 : f32 to vector<4x1xf32>
    %52 = arith.subf %51, %47 : vector<4x1xf32>
    %53 = vector.shape_cast %50 : vector<1x2xi1> to vector<1x2xi1>
    %54 = vector.broadcast %53 : vector<1x2xi1> to vector<4x2xi1>
    %55 = vector.shape_cast %47 : vector<4x1xf32> to vector<4x1xf32>
    %56 = vector.broadcast %55 : vector<4x1xf32> to vector<4x2xf32>
    %57 = vector.shape_cast %52 : vector<4x1xf32> to vector<4x1xf32>
    %58 = vector.broadcast %57 : vector<4x1xf32> to vector<4x2xf32>
    %59 = arith.select %54, %56, %58 : vector<4x2xi1>, vector<4x2xf32>
    %c0_26 = arith.constant 0 : index
    %c0_27 = arith.constant 0 : index
    %c0_28 = arith.constant 0 : index
    %60 = vector.load %arg7[%c0_26, %c0_27, %c0_28] : memref<1x4x2xf32, #tpu.memory_space<vmem>>, vector<1x4x2xf32>
    %61 = vector.shape_cast %60 : vector<1x4x2xf32> to vector<4x2xf32>
    %62 = vector.shape_cast %59 : vector<4x2xf32> to vector<1x4x2xf32>
    tpu.vector_store %arg7[%c0_26, %c0_27, %c0_28], %62 {strides = array<i32>} : memref<1x4x2xf32, #tpu.memory_space<vmem>>, vector<1x4x2xf32>,
    return
  }
  func.func @transform_0(%arg0: i32) -> (i32, i32, i32) {
    %c0_i32 = arith.constant 0 : i32
    %c0_i32_0 = arith.constant 0 : i32
    %c0_i32_1 = arith.constant 0 : i32
    return %arg0, %c0_i32, %c0_i32_0 : i32, i32, i32
  }
  func.func @transform_1(%arg0: i32) -> (i32, i32) {
    %c0_i32 = arith.constant 0 : i32
    %c0_i32_0 = arith.constant 0 : i32
    %c0_i32_1 = arith.constant 0 : i32
    return %c0_i32, %c0_i32_0 : i32, i32
  }
  func.func @transform_2(%arg0: i32) -> (i32, i32) {
    %c0_i32 = arith.constant 0 : i32
    %c0_i32_0 = arith.constant 0 : i32
    %c0_i32_1 = arith.constant 0 : i32
    return %c0_i32, %c0_i32_0 : i32, i32
  }
  func.func @transform_3(%arg0: i32) -> (i32, i32) {
    %c0_i32 = arith.constant 0 : i32
    %c0_i32_0 = arith.constant 0 : i32
    %c0_i32_1 = arith.constant 0 : i32
    return %c0_i32, %c0_i32_0 : i32, i32
  }
  func.func @transform_4(%arg0: i32) -> (i32, i32) {
    %c0_i32 = arith.constant 0 : i32
    %c0_i32_0 = arith.constant 0 : i32
    %c0_i32_1 = arith.constant 0 : i32
    return %c0_i32, %c0_i32_0 : i32, i32
  }
  func.func @transform_5(%arg0: i32) -> (i32, i32) {
    %c0_i32 = arith.constant 0 : i32
    %c0_i32_0 = arith.constant 0 : i32
    %c0_i32_1 = arith.constant 0 : i32
    return %c0_i32, %c0_i32_0 : i32, i32
  }
  func.func @transform_6(%arg0: i32) -> (i32, i32, i32) {
    %c0_i32 = arith.constant 0 : i32
    %c0_i32_0 = arith.constant 0 : i32
    %c0_i32_1 = arith.constant 0 : i32
    return %arg0, %c0_i32, %c0_i32_0 : i32, i32, i32
  }
  func.func @transform_7(%arg0: i32) -> (i32, i32, i32) {
    %c0_i32 = arith.constant 0 : i32
    %c0_i32_0 = arith.constant 0 : i32
    %c0_i32_1 = arith.constant 0 : i32
    return %arg0, %c0_i32, %c0_i32_0 : i32, i32, i32
  }
}

</mosaic_0001>

<llo_original>
// kernel: jug_forward.1
$region0: #{jug_forward.1}
  #allocation0 [shape = 'u32[]', space=smem, size = 0x4, offset = 0x4, fixed_abs, tag = 'smem constant byte address 0x4 - core index']
  #allocation1 [shape = 'u32[72,128]{1,0:T(1,128)}', space=vmem, size = 0x9000, scoped, tag = 'internal scratch']
  %s0 = inlined_call_operand.vmem [shape: bf16[2,256,64], index: 0, kind: input, shape index: {}]
  %s1 = inlined_call_operand.vmem [shape: bf16[4,256], index: 1, kind: input, shape index: {}]
  %s2 = inlined_call_operand.vmem [shape: bf16[64,4], index: 2, kind: input, shape index: {}]
  %s3 = inlined_call_operand.vmem [shape: bf16[4,2], index: 3, kind: input, shape index: {}]
  %s4 = inlined_call_operand.vmem [shape: f32[1,4], index: 4, kind: input, shape index: {}]
  %s5 = inlined_call_operand.vmem [shape: f32[1,2], index: 5, kind: input, shape index: {}]
  %s6 = inlined_call_operand.vmem [shape: f32[2,4,2], index: 6, kind: output, shape index: {0}]
  %s7 = inlined_call_operand.vmem [shape: f32[2,4,2], index: 7, kind: output, shape index: {1}]
  %8 = xla_tuple %s6, %s7
  %s9 = sld [smem:[#allocation0]]
  $region65: #{jug_forward.1} parent=0
    _
  %s11 = ssub.s32 1, %s9
  %s12 = scalar_select 0, %s11, %s9
  loop: start=0, step=1, limit=4
  $region2: #{jug_forward.1} parent=0 // loop_pre_header
    _
  $region3: #{jug_forward.1} parent=0 // loop_header
    %s14 = sphi 0, %s18
    %p15 = scmp.ge.s32.totalorder %s14, 4
    %s24 = sphi 0, %s26
    %s27 = sphi 0, %s24
    %s28 = sphi 0, %s27
    %s44 = sphi 0, %s28
    %s48 = sphi 0, %s48
    %s50 = sphi 0, %s48
    %s51 = sphi 0, %s50
    %s65 = sphi 0, %s51
    %s69 = sphi 0, %s69
    %s71 = sphi 0, %s69
    %s72 = sphi 0, %s71
    %s86 = sphi 0, %s72
    %s90 = sphi 0, %s90
    %s92 = sphi 0, %s90
    %s93 = sphi 0, %s92
    %s107 = sphi 0, %s93
    %s111 = sphi 0, %s111
    %s113 = sphi 0, %s111
    %s114 = sphi 0, %s113
    %s128 = sphi 0, %s114
    %s132 = sphi 0, %s132
    %s134 = sphi 0, %s132
    %s135 = sphi 0, %s134
    %s149 = sphi 0, %s135
    %s155 = sphi 0, %s157
    %s158 = sphi 0, %s155
    %s159 = sphi 0, %s158
    %s175 = sphi 0, %s159
    %s181 = sphi 0, %s183
    %s184 = sphi 0, %s181
    %s185 = sphi 0, %s184
    %s201 = sphi 0, %s185
  $region4: #{jug_forward.1} parent=0 // loop_header_branch
    %17 = sbr.rel (%p15) target = $region8
  $region5: #{jug_forward.1} parent=0 // loop_body
    %s19 = ssub.s32 %s14, 1
    %s20 = ssub.s32 %s14, 2
    %s21 = sadd.s32 %s14, 1
    %s22 = ssub.s32 %s14, %s21
    %p23 = scmp.eq.s32.totalorder %s22, 0
    %s25 = sadd.s32 %s24, 1
    %s26 = scalar_select %p23, %s24, %s25
    %p29 = pneg %p23
    %p30 = scmp.eq.s32.totalorder %s14, 1
    %p31 = por %p29, %p30
    %p32 = scmp.ne.s32.totalorder %s24, %s27
    %p33 = scmp.eq.s32.totalorder %s14, 0
    %p34 = por %p32, %p33
    %p35 = scmp.ne.s32.totalorder %s24, %s27
    %p36 = scmp.eq.s32.totalorder %s19, 1
    %p37 = por %p35, %p36
    %p38 = scmp.ne.s32.totalorder %s27, %s28
    %p39 = scmp.eq.s32.totalorder %s19, 0
    %p40 = por %p38, %p39
    %p41 = scmp.ne.s32.totalorder %s27, %s28
    %p42 = scmp.eq.s32.totalorder %s20, 1
    %p43 = por %p41, %p42
    %p45 = scmp.ne.s32.totalorder %s28, %s44
    %p46 = scmp.eq.s32.totalorder %s20, 0
    %p47 = por %p45, %p46
    %s49 = sadd.s32 %s48, 1
    %p52 = scmp.eq.s32.totalorder %s14, 1
    %p53 = scmp.ne.s32.totalorder %s48, %s50
    %p54 = scmp.eq.s32.totalorder %s14, 0
    %p55 = por %p53, %p54
    %p56 = scmp.ne.s32.totalorder %s48, %s50
    %p57 = scmp.eq.s32.totalorder %s19, 1
    %p58 = por %p56, %p57
    %p59 = scmp.ne.s32.totalorder %s50, %s51
    %p60 = scmp.eq.s32.totalorder %s19, 0
    %p61 = por %p59, %p60
    %p62 = scmp.ne.s32.totalorder %s50, %s51
    %p63 = scmp.eq.s32.totalorder %s20, 1
    %p64 = por %p62, %p63
    %p66 = scmp.ne.s32.totalorder %s51, %s65
    %p67 = scmp.eq.s32.totalorder %s20, 0
    %p68 = por %p66, %p67
    %s70 = sadd.s32 %s69, 1
    %p73 = scmp.eq.s32.totalorder %s14, 1
    %p74 = scmp.ne.s32.totalorder %s69, %s71
    %p75 = scmp.eq.s32.totalorder %s14, 0
    %p76 = por %p74, %p75
    %p77 = scmp.ne.s32.totalorder %s69, %s71
    %p78 = scmp.eq.s32.totalorder %s19, 1
    %p79 = por %p77, %p78
    %p80 = scmp.ne.s32.totalorder %s71, %s72
    %p81 = scmp.eq.s32.totalorder %s19, 0
    %p82 = por %p80, %p81
    %p83 = scmp.ne.s32.totalorder %s71, %s72
    %p84 = scmp.eq.s32.totalorder %s20, 1
    %p85 = por %p83, %p84
    %p87 = scmp.ne.s32.totalorder %s72, %s86
    %p88 = scmp.eq.s32.totalorder %s20, 0
    %p89 = por %p87, %p88
    %s91 = sadd.s32 %s90, 1
    %p94 = scmp.eq.s32.totalorder %s14, 1
    %p95 = scmp.ne.s32.totalorder %s90, %s92
    %p96 = scmp.eq.s32.totalorder %s14, 0
    %p97 = por %p95, %p96
    %p98 = scmp.ne.s32.totalorder %s90, %s92
    %p99 = scmp.eq.s32.totalorder %s19, 1
    %p100 = por %p98, %p99
    %p101 = scmp.ne.s32.totalorder %s92, %s93
    %p102 = scmp.eq.s32.totalorder %s19, 0
    %p103 = por %p101, %p102
    %p104 = scmp.ne.s32.totalorder %s92, %s93
    %p105 = scmp.eq.s32.totalorder %s20, 1
    %p106 = por %p104, %p105
    %p108 = scmp.ne.s32.totalorder %s93, %s107
    %p109 = scmp.eq.s32.totalorder %s20, 0
    %p110 = por %p108, %p109
    %s112 = sadd.s32 %s111, 1
    %p115 = scmp.eq.s32.totalorder %s14, 1
    %p116 = scmp.ne.s32.totalorder %s111, %s113
    %p117 = scmp.eq.s32.totalorder %s14, 0
    %p118 = por %p116, %p117
    %p119 = scmp.ne.s32.totalorder %s111, %s113
    %p120 = scmp.eq.s32.totalorder %s19, 1
    %p121 = por %p119, %p120
    %p122 = scmp.ne.s32.totalorder %s113, %s114
    %p123 = scmp.eq.s32.totalorder %s19, 0
    %p124 = por %p122, %p123
    %p125 = scmp.ne.s32.totalorder %s113, %s114
    %p126 = scmp.eq.s32.totalorder %s20, 1
    %p127 = por %p125, %p126
    %p129 = scmp.ne.s32.totalorder %s114, %s128
    %p130 = scmp.eq.s32.totalorder %s20, 0
    %p131 = por %p129, %p130
    %s133 = sadd.s32 %s132, 1
    %p136 = scmp.eq.s32.totalorder %s14, 1
    %p137 = scmp.ne.s32.totalorder %s132, %s134
    %p138 = scmp.eq.s32.totalorder %s14, 0
    %p139 = por %p137, %p138
    %p140 = scmp.ne.s32.totalorder %s132, %s134
    %p141 = scmp.eq.s32.totalorder %s19, 1
    %p142 = por %p140, %p141
    %p143 = scmp.ne.s32.totalorder %s134, %s135
    %p144 = scmp.eq.s32.totalorder %s19, 0
    %p145 = por %p143, %p144
    %p146 = scmp.ne.s32.totalorder %s134, %s135
    %p147 = scmp.eq.s32.totalorder %s20, 1
    %p148 = por %p146, %p147
    %p150 = scmp.ne.s32.totalorder %s135, %s149
    %p151 = scmp.eq.s32.totalorder %s20, 0
    %p152 = por %p150, %p151
    %s153 = ssub.s32 %s14, %s21
    %p154 = scmp.eq.s32.totalorder %s153, 0
    %s156 = sadd.s32 %s155, 1
    %s157 = scalar_select %p154, %s155, %s156
    %p160 = pneg %p154
    %p161 = scmp.eq.s32.totalorder %s14, 1
    %p162 = por %p160, %p161
    %p163 = scmp.ne.s32.totalorder %s155, %s158
    %p164 = scmp.eq.s32.totalorder %s14, 0
    %p165 = por %p163, %p164
    %p166 = scmp.ne.s32.totalorder %s155, %s158
    %p167 = scmp.eq.s32.totalorder %s19, 1
    %p168 = por %p166, %p167
    %p169 = scmp.ne.s32.totalorder %s158, %s159
    %p170 = scmp.eq.s32.totalorder %s19, 0
    %p171 = por %p169, %p170
    %p172 = scmp.ne.s32.totalorder %s158, %s159
    %p173 = scmp.eq.s32.totalorder %s20, 1
    %p174 = por %p172, %p173
    %p176 = scmp.ne.s32.totalorder %s159, %s175
    %p177 = scmp.eq.s32.totalorder %s20, 0
    %p178 = por %p176, %p177
    %s179 = ssub.s32 %s14, %s21
    %p180 = scmp.eq.s32.totalorder %s179, 0
    %s182 = sadd.s32 %s181, 1
    %s183 = scalar_select %p180, %s181, %s182
    %p186 = pneg %p180
    %p187 = scmp.eq.s32.totalorder %s14, 1
    %p188 = por %p186, %p187
    %p189 = scmp.ne.s32.totalorder %s181, %s184
    %p190 = scmp.eq.s32.totalorder %s14, 0
    %p191 = por %p189, %p190
    %p192 = scmp.ne.s32.totalorder %s181, %s184
    %p193 = scmp.eq.s32.totalorder %s19, 1
    %p194 = por %p192, %p193
    %p195 = scmp.ne.s32.totalorder %s184, %s185
    %p196 = scmp.eq.s32.totalorder %s19, 0
    %p197 = por %p195, %p196
    %p198 = scmp.ne.s32.totalorder %s184, %s185
    %p199 = scmp.eq.s32.totalorder %s20, 1
    %p200 = por %p198, %p199
    %p202 = scmp.ne.s32.totalorder %s185, %s201
    %p203 = scmp.eq.s32.totalorder %s20, 0
    %p204 = por %p202, %p203
    %p205 = scmp.le.s32.totalorder 1, %s14
    %p206 = scmp.lt.s32.totalorder %s14, 3
    %p207 = pnand %p205, %p206
    %p208 = pneg %p207
    // Predicated region
    $region9: #{jug_forward.1} parent=5 // pred_check
      _
    $region10: #{jug_forward.1} parent=5 // pred_check_branch
      %210 = sbr.rel (%p207) target = $region12
    $region11: #{jug_forward.1} parent=5 // pred_region
      %s211 = ssub.s32 %s14, 1
      // Predicated region
      $region13: #{jug_forward.1} parent=11 // pred_check
        %p212 = pneg %p61
      $region14: #{jug_forward.1} parent=11 // pred_check_branch
        %214 = sbr.rel (%p212) target = $region16
      $region15: #{jug_forward.1} parent=11 // pred_region
        _
      $region16: #{jug_forward.1} parent=11 // pred_fallthru
        _
      // Predicated region
      $region17: #{jug_forward.1} parent=11 // pred_check
        %p215 = pneg %p82
      $region18: #{jug_forward.1} parent=11 // pred_check_branch
        %217 = sbr.rel (%p215) target = $region20
      $region19: #{jug_forward.1} parent=11 // pred_region
        _
      $region20: #{jug_forward.1} parent=11 // pred_fallthru
        _
      // Predicated region
      $region21: #{jug_forward.1} parent=11 // pred_check
        %p218 = pneg %p103
      $region22: #{jug_forward.1} parent=11 // pred_check_branch
        %220 = sbr.rel (%p218) target = $region24
      $region23: #{jug_forward.1} parent=11 // pred_region
        _
      $region24: #{jug_forward.1} parent=11 // pred_fallthru
        _
      // Predicated region
      $region25: #{jug_forward.1} parent=11 // pred_check
        %p221 = pneg %p124
      $region26: #{jug_forward.1} parent=11 // pred_check_branch
        %223 = sbr.rel (%p221) target = $region28
      $region27: #{jug_forward.1} parent=11 // pred_region
        _
      $region28: #{jug_forward.1} parent=11 // pred_fallthru
        _
      // Predicated region
      $region29: #{jug_forward.1} parent=11 // pred_check
        %p224 = pneg %p145
      $region30: #{jug_forward.1} parent=11 // pred_check_branch
        %226 = sbr.rel (%p224) target = $region32
      $region31: #{jug_forward.1} parent=11 // pred_region
        _
      $region32: #{jug_forward.1} parent=11 // pred_fallthru
        _
    $region12: #{jug_forward.1} parent=5 // pred_fallthru
      _
    %p227 = scmp.lt.s32.totalorder %s14, 2
    // Predicated region
    $region33: #{jug_forward.1} parent=5 // pred_check
      %p228 = pneg %p227
    $region34: #{jug_forward.1} parent=5 // pred_check_branch
      %230 = sbr.rel (%p228) target = $region36
    $region35: #{jug_forward.1} parent=5 // pred_region
      // Predicated region
      $region37: #{jug_forward.1} parent=35 // pred_check
        %p231 = pneg %p34
      $region38: #{jug_forward.1} parent=35 // pred_check_branch
        %233 = sbr.rel (%p231) target = $region40
      $region39: #{jug_forward.1} parent=35 // pred_region
        %p234 = scmp.lt.s32.totalorder %s14, 1
        %s235 = scalar_select %p234, %s14, 1
        %s236 = smul.addr %s235, 32
        %s237 = smul.addr %s236, 4
        %s238 = scalar_lea.vmem %s0, %s237
      $region40: #{jug_forward.1} parent=35 // pred_fallthru
        _
    $region36: #{jug_forward.1} parent=5 // pred_fallthru
      _
    %p239 = scmp.le.s32.totalorder 1, %s14
    %p240 = scmp.lt.s32.totalorder %s14, 3
    %p241 = pnand %p239, %p240
    %p242 = pneg %p241
    // Predicated region
    $region41: #{jug_forward.1} parent=5 // pred_check
      _
    $region42: #{jug_forward.1} parent=5 // pred_check_branch
      %244 = sbr.rel (%p241) target = $region44
    $region43: #{jug_forward.1} parent=5 // pred_region
      %s245 = ssub.s32 %s14, 1
      %p246 = scmp.lt.s32.totalorder %s19, 1
      %s247 = scalar_select %p246, %s19, 1
      %s248 = smul.addr %s247, 32
      %s249 = smul.addr %s248, 4
      %s250 = scalar_lea.vmem %s0, %s249
      %p251 = pneg %p40
      %p252 = pneg %p37
      %p253 = pneg %p61
      %p254 = pneg %p58
      %p255 = pneg %p82
      %p256 = pneg %p79
      %p257 = pneg %p103
      %p258 = pneg %p100
      %p259 = pneg %p124
      %p260 = pneg %p121
      %p261 = pneg %p145
      %p262 = pneg %p142
      %p263 = pneg %p171
      %p264 = pneg %p168
      %p265 = scmp.lt.s32.totalorder %s19, 1
      %s266 = scalar_select %p265, %s19, 1
      %s267 = smul.addr %s266, 4
      %s268 = scalar_lea.vmem %s6, %s267
      %p269 = pneg %p197
      %p270 = pneg %p194
      %p271 = scmp.lt.s32.totalorder %s19, 1
      %s272 = scalar_select %p271, %s19, 1
      %s273 = smul.addr %s272, 4
      %s274 = scalar_lea.vmem %s7, %s273
      %p275 = scmp.lt.s32.totalorder %s19, 1
      %s276 = scalar_select %p275, %s19, 1
      %s277 = smul.addr %s276, 32
      %s278 = smul.addr %s277, 4
      %s279 = scalar_lea.vmem %s0, %s278
      %p280 = scmp.lt.s32.totalorder %s19, 1
      %s281 = scalar_select %p280, %s19, 1
      %s282 = smul.addr %s281, 4
      %s283 = scalar_lea.vmem %s6, %s282
      %p284 = scmp.lt.s32.totalorder %s19, 1
      %s285 = scalar_select %p284, %s19, 1
      %s286 = smul.addr %s285, 4
      %s287 = scalar_lea.vmem %s7, %s286
      %v289 = vld [vmem:[%s279] sm:$0xf]
      %v290 = vld [vmem:[%s279 + $0x4] sm:$0xf]
      %v291 = vld [vmem:[%s279 + $0x8] sm:$0xf]
      %v292 = vld [vmem:[%s279 + $0xc] sm:$0xf]
      %v293 = vld [vmem:[%s279 + $0x10] sm:$0xf]
      %v294 = vld [vmem:[%s279 + $0x14] sm:$0xf]
      %v295 = vld [vmem:[%s279 + $0x18] sm:$0xf]
      %v296 = vld [vmem:[%s279 + $0x1c] sm:$0xf]
      %v297 = vld [vmem:[%s279 + $0x20] sm:$0xf]
      %v298 = vld [vmem:[%s279 + $0x24] sm:$0xf]
      %v299 = vld [vmem:[%s279 + $0x28] sm:$0xf]
      %v300 = vld [vmem:[%s279 + $0x2c] sm:$0xf]
      %v301 = vld [vmem:[%s279 + $0x30] sm:$0xf]
      %v302 = vld [vmem:[%s279 + $0x34] sm:$0xf]
      %v303 = vld [vmem:[%s279 + $0x38] sm:$0xf]
      %v304 = vld [vmem:[%s279 + $0x3c] sm:$0xf]
      %v305 = vld [vmem:[%s279 + $0x40] sm:$0xf]
      %v306 = vld [vmem:[%s279 + $0x44] sm:$0xf]
      %v307 = vld [vmem:[%s279 + $0x48] sm:$0xf]
      %v308 = vld [vmem:[%s279 + $0x4c] sm:$0xf]
      %v309 = vld [vmem:[%s279 + $0x50] sm:$0xf]
      %v310 = vld [vmem:[%s279 + $0x54] sm:$0xf]
      %v311 = vld [vmem:[%s279 + $0x58] sm:$0xf]
      %v312 = vld [vmem:[%s279 + $0x5c] sm:$0xf]
      %v313 = vld [vmem:[%s279 + $0x60] sm:$0xf]
      %v314 = vld [vmem:[%s279 + $0x64] sm:$0xf]
      %v315 = vld [vmem:[%s279 + $0x68] sm:$0xf]
      %v316 = vld [vmem:[%s279 + $0x6c] sm:$0xf]
      %v317 = vld [vmem:[%s279 + $0x70] sm:$0xf]
      %v318 = vld [vmem:[%s279 + $0x74] sm:$0xf]
      %v319 = vld [vmem:[%s279 + $0x78] sm:$0xf]
      %v320 = vld [vmem:[%s279 + $0x7c] sm:$0xf]
      %v321 = vld [vmem:[%s1] sm:$0xf]
      %323 = vst [vmem:[#allocation1] ss:$4 sm:$0xff] %v321
      %v324 = vld.sshfl [vmem:[#allocation1] sm:$0xff pattern:$0x73625140]
      %v325 = vld.sshfl [vmem:[#allocation1 + $0x8] sm:$0xff pattern:$0x73625140]
      %v360 = vunpack.c.l.b16 %v289
      %v361 = vunpack.c.l.b16 %v290
      %v362 = vunpack.c.l.b16 %v291
      %v363 = vunpack.c.l.b16 %v292
      %v364 = vunpack.c.l.b16 %v293
      %v365 = vunpack.c.l.b16 %v294
      %v366 = vunpack.c.l.b16 %v295
      %v367 = vunpack.c.l.b16 %v296
      %v368 = vunpack.c.l.b16 %v297
      %v369 = vunpack.c.l.b16 %v298
      %v370 = vunpack.c.l.b16 %v299
      %v371 = vunpack.c.l.b16 %v300
      %v372 = vunpack.c.l.b16 %v301
      %v373 = vunpack.c.l.b16 %v302
      %v374 = vunpack.c.l.b16 %v303
      %v375 = vunpack.c.l.b16 %v304
      %v376 = vunpack.c.l.b16 %v305
      %v377 = vunpack.c.l.b16 %v306
      %v378 = vunpack.c.l.b16 %v307
      %v379 = vunpack.c.l.b16 %v308
      %v380 = vunpack.c.l.b16 %v309
      %v381 = vunpack.c.l.b16 %v310
      %v382 = vunpack.c.l.b16 %v311
      %v383 = vunpack.c.l.b16 %v312
      %v384 = vunpack.c.l.b16 %v313
      %v385 = vunpack.c.l.b16 %v314
      %v386 = vunpack.c.l.b16 %v315
      %v387 = vunpack.c.l.b16 %v316
      %v388 = vunpack.c.l.b16 %v317
      %v389 = vunpack.c.l.b16 %v318
      %v390 = vunpack.c.l.b16 %v319
      %v391 = vunpack.c.l.b16 %v320
      %v392 = vpack.c.b16 %v361, %v360
      %v393 = vpack.c.b16 %v363, %v362
      %v394 = vpack.c.b16 %v365, %v364
      %v395 = vpack.c.b16 %v367, %v366
      %v396 = vpack.c.b16 %v369, %v368
      %v397 = vpack.c.b16 %v371, %v370
      %v398 = vpack.c.b16 %v373, %v372
      %v399 = vpack.c.b16 %v375, %v374
      %v400 = vpack.c.b16 %v377, %v376
      %v401 = vpack.c.b16 %v379, %v378
      %v402 = vpack.c.b16 %v381, %v380
      %v403 = vpack.c.b16 %v383, %v382
      %v404 = vpack.c.b16 %v385, %v384
      %v405 = vpack.c.b16 %v387, %v386
      %v406 = vpack.c.b16 %v389, %v388
      %v407 = vpack.c.b16 %v391, %v390
      %424 = vmatpush.bf16.msra.mxu0 %v399
      %425 = vmatpush.bf16.msra.mxu0 %v398
      %426 = vmatpush.bf16.msra.mxu0 %v397
      %427 = vmatpush.bf16.msra.mxu0 %v396
      %428 = vmatpush.bf16.msra.mxu0 %v395
      %429 = vmatpush.bf16.msra.mxu0 %v394
      %430 = vmatpush.bf16.msra.mxu0 %v393
      %431 = vmatpush.bf16.msra.mxu0 %v392
      %432 = vmatmul.bf16.gmra.mxu0 %v324
      %v433 = vpop.f32.mrf.mxu0
      %v434 = vadd.f32 0.0, %v433
      %v435 = vpop.f32.mrf.mxu0
      %436 = vdwg.mxu0
      %437 = vmatpush.bf16.msra.mxu0 %v407
      %438 = vmatpush.bf16.msra.mxu0 %v406
      %439 = vmatpush.bf16.msra.mxu0 %v405
      %440 = vmatpush.bf16.msra.mxu0 %v404
      %441 = vmatpush.bf16.msra.mxu0 %v403
      %442 = vmatpush.bf16.msra.mxu0 %v402
      %443 = vmatpush.bf16.msra.mxu0 %v401
      %444 = vmatpush.bf16.msra.mxu0 %v400
      %445 = vmatmul.bf16.gmra.mxu0 %v325
      %v446 = vpop.f32.mrf.mxu0
      %v447 = vadd.f32 %v434, %v446
      %v448 = vpop.f32.mrf.mxu0
      %449 = vdwg.mxu0
      %v450 = vmax.f32 %v447, 0.0
      %v451 = vpack.c.bf16 %v450, %v450
      %v452 = vld [vmem:[%s2] sm:$0xf]
      %v453 = vld [vmem:[%s2 + $0x4] sm:$0xf]
      %v454 = vld [vmem:[%s2 + $0x8] sm:$0xf]
      %v455 = vld [vmem:[%s2 + $0xc] sm:$0xf]
      %v456 = vld [vmem:[%s2 + $0x10] sm:$0xf]
      %v457 = vld [vmem:[%s2 + $0x14] sm:$0xf]
      %v458 = vld [vmem:[%s2 + $0x18] sm:$0xf]
      %v459 = vld [vmem:[%s2 + $0x1c] sm:$0xf]
      %v460 = vld [vmem:[%s4] sm:$0x1]
      %v462 = vperm.slane %v460, 0
      %v472 = vunpack.c.l.b16 %v452
      %v473 = vunpack.c.l.b16 %v453
      %v474 = vunpack.c.l.b16 %v454
      %v475 = vunpack.c.l.b16 %v455
      %v476 = vunpack.c.l.b16 %v456
      %v477 = vunpack.c.l.b16 %v457
      %v478 = vunpack.c.l.b16 %v458
      %v479 = vunpack.c.l.b16 %v459
      %v480 = vpack.c.b16 %v473, %v472
      %v481 = vpack.c.b16 %v475, %v474
      %v482 = vpack.c.b16 %v477, %v476
      %v483 = vpack.c.b16 %v479, %v478
      %vm488 = vcmask 523264
      %v490 = vsel %vm488, %v451, 0
      %492 = vmatpush.bf16.msra.mxu0 0
      %493 = vmatpush.bf16.msra.mxu0 0
      %494 = vmatpush.bf16.msra.mxu0 0
      %495 = vmatpush.bf16.msra.mxu0 0
      %496 = vmatpush.bf16.msra.mxu0 %v483
      %497 = vmatpush.bf16.msra.mxu0 %v482
      %498 = vmatpush.bf16.msra.mxu0 %v481
      %499 = vmatpush.bf16.msra.mxu0 %v480
      %500 = vmatmul.bf16.gmra.mxu0 %v490
      %v501 = vpop.f32.mrf.mxu0
      %v502 = vadd.f32 %v462, %v501
      %v503 = vpop.f32.mrf.mxu0
      %504 = vdwg.mxu0
      %v505 = vmax.f32 %v502, 0.0
      %v506 = vpack.c.bf16 %v505, %v505
      %v507 = vld [vmem:[%s3] sm:$0x3]
      %v508 = vld [vmem:[%s5] sm:$0x1]
      %v510 = vperm.slane %v508, 0
      %vm512 = vcmask 31744
      %v514 = vsel %vm512, %v506, 0
      %vm516 = vcmask 1041408
      %v518 = vsel %vm516, %v507, 0
      %520 = vmatpush.bf16.msra.mxu0 0
      %521 = vmatpush.bf16.msra.mxu0 0
      %522 = vmatpush.bf16.msra.mxu0 0
      %523 = vmatpush.bf16.msra.mxu0 0
      %524 = vmatpush.bf16.msra.mxu0 0
      %525 = vmatpush.bf16.msra.mxu0 0
      %526 = vmatpush.bf16.msra.mxu0 0
      %527 = vmatpush.bf16.msra.mxu0 %v518
      %528 = vmatmul.bf16.gmra.mxu0 %v514
      %v529 = vpop.f32.mrf.mxu0
      %v530 = vadd.f32 %v510, %v529
      %v531 = vpop.f32.mrf.mxu0
      %532 = vdwg.mxu0
      %v533 = vand.u32 2147483647, %v530
      %v534 = vsub.f32 0.0, %v533
      %v535 = vmul.f32 %v534, 1.442695
      %v536 = vpow.pop %v535
      %v537 = vadd.f32 %v536, 1.0
      %v538 = vrcp.pop %v537
      %vm539 = vcmp.ge.f32.partialorder %v530, 0.0
      %v540 = vmul.f32 %v536, %v538
      %v541 = vsel %vm539, %v538, %v540
      %vm542 = vcmask 11264
      %543 = vst.msk [vmem:[%s287] sm:$0xf] %vm542, %v541
      %545 = vrot.lane.b32.xlu0 %v530, 1
      %v546 = vpop.permute.xlu0 %545
      %v548 = vsub.f32 %v530, %v546
      %v549 = vand.u32 2147483647, %v548
      %v550 = vsub.f32 0.0, %v549
      %v551 = vmul.f32 %v550, 1.442695
      %v552 = vpow.pop %v551
      %v553 = vadd.f32 %v552, 1.0
      %v554 = vrcp.pop %v553
      %vm555 = vcmp.ge.f32.partialorder %v548, 0.0
      %v556 = vmul.f32 %v552, %v554
      %v557 = vsel %vm555, %v554, %v556
      %v558 = vlaneseq
      %v559 = vand.u32 %v558, 127
      %vm560 = vcmp.eq.s32.totalorder %v559, 1
      %v561 = vsub.f32 1.0, %v557
      %v562 = vsel %vm560, 1, 0
      %vm563 = vcmp.eq.s32.totalorder %v562, 1
      %565 = vset.pattern.permute.xlu0 1
      %566 = vperm.xlu0 %565, %v557
      %v567 = vpop.permute.xlu0 %566
      %570 = vset.pattern.permute.xlu0 1
      %571 = vperm.xlu0 %570, %v561
      %v572 = vpop.permute.xlu0 %571
      %v574 = vsel %vm563, %v567, %v572
      %575 = vst.msk [vmem:[%s283] sm:$0xf] %vm542, %v574
      %p576 = scmp.lt.s32.totalorder %s19, 1
      %s577 = scalar_select %p576, %s19, 1
      %s578 = smul.addr %s577, 4
      %s579 = scalar_lea.vmem %s6, %s578
      %p580 = scmp.lt.s32.totalorder %s19, 1
      %s581 = scalar_select %p580, %s19, 1
      %s582 = smul.addr %s581, 4
      %s583 = scalar_lea.vmem %s7, %s582
      // Predicated region
      $region45: #{jug_forward.1} parent=43 // pred_check
        %p584 = pneg %p168
      $region46: #{jug_forward.1} parent=43 // pred_check_branch
        %586 = sbr.rel (%p584) target = $region48
      $region47: #{jug_forward.1} parent=43 // pred_region
        _
      $region48: #{jug_forward.1} parent=43 // pred_fallthru
        _
      // Predicated region
      $region49: #{jug_forward.1} parent=43 // pred_check
        %p587 = pneg %p194
      $region50: #{jug_forward.1} parent=43 // pred_check_branch
        %589 = sbr.rel (%p587) target = $region52
      $region51: #{jug_forward.1} parent=43 // pred_region
        _
      $region52: #{jug_forward.1} parent=43 // pred_fallthru
        _
    $region44: #{jug_forward.1} parent=5 // pred_fallthru
      _
    %p590 = scmp.le.s32.totalorder 2, %s14
    // Predicated region
    $region53: #{jug_forward.1} parent=5 // pred_check
      %p591 = pneg %p590
    $region54: #{jug_forward.1} parent=5 // pred_check_branch
      %593 = sbr.rel (%p591) target = $region56
    $region55: #{jug_forward.1} parent=5 // pred_region
      %s594 = ssub.s32 %s14, 2
      // Predicated region
      $region57: #{jug_forward.1} parent=55 // pred_check
        %p595 = pneg %p174
      $region58: #{jug_forward.1} parent=55 // pred_check_branch
        %597 = sbr.rel (%p595) target = $region60
      $region59: #{jug_forward.1} parent=55 // pred_region
        %p598 = scmp.lt.s32.totalorder %s20, 1
        %s599 = scalar_select %p598, %s20, 1
        %s600 = smul.addr %s599, 4
        %s601 = scalar_lea.vmem %s6, %s600
      $region60: #{jug_forward.1} parent=55 // pred_fallthru
        _
      // Predicated region
      $region61: #{jug_forward.1} parent=55 // pred_check
        %p602 = pneg %p200
      $region62: #{jug_forward.1} parent=55 // pred_check_branch
        %604 = sbr.rel (%p602) target = $region64
      $region63: #{jug_forward.1} parent=55 // pred_region
        %p605 = scmp.lt.s32.totalorder %s20, 1
        %s606 = scalar_select %p605, %s20, 1
        %s607 = smul.addr %s606, 4
        %s608 = scalar_lea.vmem %s7, %s607
      $region64: #{jug_forward.1} parent=55 // pred_fallthru
        _
    $region56: #{jug_forward.1} parent=5 // pred_fallthru
      _
  $region6: #{jug_forward.1} parent=0 // loop_footer
    %s18 = sadd.s32 1, %s14
  $region7: #{jug_forward.1} parent=0 // loop_footer_branch
    %13 = sbr.rel target = $region3
  $region8: #{jug_forward.1} parent=0 // loop_exit
    _

</llo_original>
